<compile_context>
chip_gen: v7x
topology: tpu7x:2x2x1
jax: 0.10.0
libtpu: 0.0.40
codegen_flags: <defaults>
</compile_context>

<pallas_src>
import functools

import jax
import jax.numpy as jnp
import numpy as np
from jax.experimental import pallas as pl
from jax.experimental.pallas import tpu as pltpu


def _round_up(x, m):
  return (x + m - 1) // m * m


# ----------------------------------------------------------------------------
# GCE weighting (GeneralizedCELoss forward), shared by kernel and reference
# ----------------------------------------------------------------------------
def _gce_weight(l1, gce, q):
  if gce == "tanh":
    return jnp.tanh((1.0 / l1) ** q)
  if gce == "sigmoid":
    return 2.0 * jax.nn.sigmoid(-l1)
  if gce == "test1":
    return jnp.exp(-l1 / q)
  if gce == "test2":
    return 1.0 / (1.0 + q * q * l1 * l1)
  return jnp.zeros_like(l1)


# ----------------------------------------------------------------------------
# Kernel: the whole text_model forward in one call
# ----------------------------------------------------------------------------
def _text_model_kernel(*refs, batch, sdp, q, gce, lambda_dis, swap_scale, do_swap):
  f32 = jnp.float32
  if do_swap:
    (x_ref, labels_ref, labels_swap_ref, perm_ref,
     wpost_ref, bpost_ref, wtop_ref, wbot_ref, bfeat_ref, wfin_ref, bfin_ref,
     feat_c_ref, pred_mix_ref, loss_b_ref, loss_ref,
     bot_scr, swap_scr) = refs
  else:
    (x_ref, labels_ref,
     wpost_ref, bpost_ref, wtop_ref, wbot_ref, bfeat_ref, wfin_ref, bfin_ref,
     feat_c_ref, loss_b_ref, loss_ref) = refs

  # post_text_layer_1 + ReLU for BOTH branches: one packed (text_out, 2*sdp) matmul.
  h = jnp.maximum(
      jnp.dot(x_ref[...], wpost_ref[...], preferred_element_type=f32)
      + bpost_ref[...], 0.0)
  h = h.astype(wtop_ref.dtype)          # MXU operand dtype (bf16 on v6e/v7x), epilogue f32
  h_c = h[:, :sdp]                      # lane-aligned split (sdp is a multiple of 128)
  h_b = h[:, sdp:]

  # Feature layer for both branches, split along K (z = [h_c | h_b], no concat).
  top = jnp.dot(h_c, wtop_ref[...], preferred_element_type=f32)    # (B, 2*sdp)
  bot = jnp.dot(h_b, wbot_ref[...], preferred_element_type=f32)    # (B, 2*sdp)

  bfeat = bfeat_ref[...]
  wfin = wfin_ref[...]
  bfin = bfin_ref[...]
  labels = labels_ref[...]
  inv_b = 1.0 / batch

  # ---- main path (z_c / z_b; detach() is numerically a no-op) ----
  feat = jnp.maximum(top + bot + bfeat, 0.0)                       # (B, 2*sdp)
  feat_c_ref[...] = feat[:, :sdp]                                  # batch_feature_c
  # model_b.final (out_features = 1): VPU multiply + lane reduction (no 1-lane matmul).
  scores = jnp.sum(feat[:, sdp:] * wfin, axis=-1, keepdims=True) + bfin   # (B, 1)
  l1 = jnp.abs(scores - labels)                                    # nn.L1Loss(reduction='none')
  loss_b_ref[...] = l1
  dis_mean = jnp.sum(_gce_weight(l1, gce, q) * l1, axis=0, keepdims=True) * inv_b

  if do_swap:
    # ---- swap path: row-permute bot (== (P @ h_b) @ Wf_bot); reuse `top`. ----
    bot_scr[...] = bot

    @pl.loop(0, batch)
    def _(i):
      j = perm_ref[i]                                              # SMEM scalar read
      swap_scr[pl.ds(i, 1), :] = bot_scr[pl.ds(j, 1), :]

    feat_swap = jnp.maximum(top + swap_scr[...] + bfeat, 0.0)
    pred_mix_ref[...] = feat_swap[:, :sdp]                         # pred_mix_conflict
    scores_swap = jnp.sum(feat_swap[:, sdp:] * wfin, axis=-1, keepdims=True) + bfin
    l1_swap = jnp.abs(scores_swap - labels_swap_ref[...])
    swap_mean = jnp.sum(_gce_weight(l1_swap, gce, q) * l1_swap,
                        axis=0, keepdims=True) * inv_b
    # loss = lambda_swap*lambda_dis*loss_swap_align.mean() + lambda_dis*loss_dis_align.mean()
    loss_ref[...] = swap_scale * swap_mean + lambda_dis * dis_mean
  else:
    loss_ref[...] = lambda_dis * dis_mean


# ----------------------------------------------------------------------------
# Wrapper
# ----------------------------------------------------------------------------
def _vmem():
  return pl.BlockSpec(memory_space=pltpu.MemorySpace.VMEM)


def _smem():
  return pl.BlockSpec(memory_space=pltpu.MemorySpace.SMEM)


def text_model_forward(text_feat, labels, kparams, args, epoch=0, perm_indices=None):
  """Matches text_model.forward: returns (loss, loss_b, batch_feature_c, pred_mix_conflict)."""
  meta = kparams["meta"]
  batch, text_out = text_feat.shape
  sd, sdp = meta["swap_dim"], meta["sdp"]
  assert text_out == meta["text_out"]

  do_swap = epoch > args["swap_epochs"]
  x = text_feat.astype(meta["mxu_dtype"])           # bf16 MXU operands: halves input DMA

  weights = (kparams["post_w"], kparams["post_b"], kparams["feat_w_top"],
             kparams["feat_w_bot"], kparams["feat_b"], kparams["final_w"],
             kparams["final_b"])

  if do_swap:
    if perm_indices is None:
      perm_indices = np.random.permutation(batch)   # host-side, like the PyTorch code
    perm = jnp.asarray(np.asarray(perm_indices), dtype=jnp.int32)      # (B,) indices only
    labels_swap = jnp.take(labels, perm, axis=0)                       # host/XLA gather
    swap_scale = float(args["lambda_swap"]) * float(args["lambda_dis"])
    operands = (x, labels, labels_swap, perm) + weights
    in_specs = [_vmem()] * 3 + [_smem()] + [_vmem()] * len(weights)
    out_shape = (jax.ShapeDtypeStruct((batch, sdp), jnp.float32),   # batch_feature_c
                 jax.ShapeDtypeStruct((batch, sdp), jnp.float32),   # pred_mix_conflict
                 jax.ShapeDtypeStruct((batch, 1), jnp.float32),     # loss_b
                 jax.ShapeDtypeStruct((1, 1), jnp.float32))         # loss
    scratch = [pltpu.VMEM((batch, 2 * sdp), jnp.float32),           # bot
               pltpu.VMEM((batch, 2 * sdp), jnp.float32)]           # permuted bot
  else:
    # Static specialization: the whole swap half is compiled out during warm-up.
    swap_scale = 0.0
    operands = (x, labels) + weights
    in_specs = [_vmem()] * (2 + len(weights))
    out_shape = (jax.ShapeDtypeStruct((batch, sdp), jnp.float32),
                 jax.ShapeDtypeStruct((batch, 1), jnp.float32),
                 jax.ShapeDtypeStruct((1, 1), jnp.float32))
    scratch = []

  nbytes = lambda a: int(np.prod(a.shape)) * jnp.dtype(a.dtype).itemsize
  flops = (2 * batch * text_out * 2 * sdp             # packed post layer
           + 2 * 2 * batch * sdp * 2 * sdp            # feature layer (top + bot)
           + (2 if do_swap else 1) * 2 * batch * sdp)  # final layer(s) on the VPU
  cost = pl.CostEstimate(
      flops=int(flops),
      transcendentals=int((2 if do_swap else 1) * batch),
      bytes_accessed=int(sum(nbytes(a) for a in operands)
                         + sum(nbytes(s) for s in out_shape)))

  kernel = functools.partial(
      _text_model_kernel, batch=batch, sdp=sdp, q=float(args["q"]), gce=args["gce"],
      lambda_dis=float(args["lambda_dis"]), swap_scale=swap_scale, do_swap=do_swap)

  outs = pl.pallas_call(
      kernel,
      out_shape=out_shape,
      in_specs=in_specs,
      out_specs=tuple(_vmem() for _ in out_shape),
      scratch_shapes=scratch,
      cost_estimate=cost,
  )(*operands)

  if do_swap:
    feat_c, pred_mix, loss_b, loss = outs
    if sdp != sd:
      pred_mix = pred_mix[:, :sd]
  else:
    feat_c, loss_b, loss = outs
    pred_mix = jnp.zeros((), jnp.float32)             # torch: pred_mix_conflict = 0
  if sdp != sd:
    feat_c = feat_c[:, :sd]
  return loss[0, 0], loss_b, feat_c, pred_mix


# ----------------------------------------------------------------------------
# Deterministic parameter init (torch layout) + one-time kernel packing
# ----------------------------------------------------------------------------
def init_params(key, *, text_out, swap_dim):
  def dense(k, out_f, in_f, s=0.1):
    kw, kb = jax.random.split(k)
    return (s * jax.random.normal(kw, (out_f, in_f), jnp.float32),
            s * jax.random.normal(kb, (out_f,), jnp.float32))

  def branch(k):
    ks = jax.random.split(k, 3)
    pw, pb = dense(ks[0], swap_dim, text_out)        # post_text_layer_1
    fw, fb = dense(ks[1], swap_dim, 2 * swap_dim)    # feature: Linear(2*swap_dim, swap_dim)
    lw, lb = dense(ks[2], 1, swap_dim)               # final: Linear(swap_dim, 1)
    return dict(post_w=pw, post_b=pb, feat_w=fw, feat_b=fb, final_w=lw, final_b=lb)

  kc, kb = jax.random.split(key)
  return dict(c=branch(kc), b=branch(kb))


def pack_kernel_params(params, *, mxu_dtype=jnp.bfloat16, lane=128):
  """Pre-transpose, zero-pad swap_dim to a lane-dense multiple of 128 and pack the
  c|b branch pair into single wide matmul operands (done ONCE, not per forward)."""
  c, b = params["c"], params["b"]
  sd, text_out = c["post_w"].shape                   # torch layout: (out, in)
  sdp = _round_up(sd, lane)

  def pad_to(a, shape):
    out = np.zeros(shape, np.float32)
    a = np.asarray(a, np.float32)
    out[:a.shape[0], :a.shape[1]] = a
    return out

  def bias_pad(v, n):
    out = np.zeros((1, n), np.float32)
    out[0, :v.shape[0]] = np.asarray(v, np.float32)
    return out

  def post_wt(bp):                                   # (text_out, sdp)
    return pad_to(np.asarray(bp["post_w"]).T, (text_out, sdp))

  def feat_halves(bp):                               # two (sdp, sdp) blocks
    wt = np.asarray(bp["feat_w"]).T                  # (2*sd, sd): rows [:sd]=h_c, [sd:]=h_b
    return pad_to(wt[:sd], (sdp, sdp)), pad_to(wt[sd:], (sdp, sdp))

  wpost = np.concatenate([post_wt(c), post_wt(b)], axis=1)                  # (text_out, 2*sdp)
  bpost = np.concatenate([bias_pad(c["post_b"], sdp), bias_pad(b["post_b"], sdp)], axis=1)
  ct, cb = feat_halves(c)
  bt, bb = feat_halves(b)
  wtop = np.concatenate([ct, bt], axis=1)                                   # (sdp, 2*sdp)
  wbot = np.concatenate([cb, bb], axis=1)                                   # (sdp, 2*sdp)
  bfeat = np.concatenate([bias_pad(c["feat_b"], sdp), bias_pad(b["feat_b"], sdp)], axis=1)
  wfin = pad_to(np.asarray(b["final_w"]), (1, sdp))                         # (1, sdp)
  bfin = np.asarray(b["final_b"], np.float32).reshape(1, 1)

  return dict(
      post_w=jnp.asarray(wpost, mxu_dtype),
      post_b=jnp.asarray(bpost, jnp.float32),
      feat_w_top=jnp.asarray(wtop, mxu_dtype),
      feat_w_bot=jnp.asarray(wbot, mxu_dtype),
      feat_b=jnp.asarray(bfeat, jnp.float32),
      final_w=jnp.asarray(wfin, jnp.float32),
      final_b=jnp.asarray(bfin, jnp.float32),
      meta=dict(swap_dim=int(sd), sdp=int(sdp), text_out=int(text_out),
                mxu_dtype=jnp.dtype(mxu_dtype)))


# ----------------------------------------------------------------------------
# Pure-JAX reference (f32, HIGHEST matmul precision) for checking
# ----------------------------------------------------------------------------
def _ref_forward(text_feat, labels, params, args, epoch, perm_indices):
  P = jax.lax.Precision.HIGHEST
  mm = lambda a, b: jnp.matmul(a, b, precision=P)
  relu = jax.nn.relu
  c, b = params["c"], params["b"]

  h_c = relu(mm(text_feat, c["post_w"].T) + c["post_b"])
  h_b = relu(mm(text_feat, b["post_w"].T) + b["post_b"])
  z = jnp.concatenate([h_c, h_b], axis=1)
  feat_c = relu(mm(z, c["feat_w"].T) + c["feat_b"])
  feat_b = relu(mm(z, b["feat_w"].T) + b["feat_b"])
  scores_b1 = mm(feat_b, b["final_w"].T) + b["final_b"]
  loss_b = jnp.abs(scores_b1 - labels)

  def gce(logits, targets):
    l1 = jnp.abs(logits - targets)
    return _gce_weight(l1, args["gce"], args["q"]) * l1

  loss_dis_align = gce(scores_b1, labels)
  if epoch > args["swap_epochs"]:
    idx = np.asarray(perm_indices)
    h_b_swap = h_b[idx]
    label_swap = labels[idx]
    z_mix = jnp.concatenate([h_c, h_b_swap], axis=1)
    pred_mix_conflict = relu(mm(z_mix, c["feat_w"].T) + c["feat_b"])
    pma = relu(mm(z_mix, b["feat_w"].T) + b["feat_b"])
    pma = mm(pma, b["final_w"].T) + b["final_b"]
    loss_swap_align = gce(pma, label_swap)
    lambda_swap = float(args["lambda_swap"])
  else:
    loss_swap_align = jnp.zeros((1,), jnp.float32)
    lambda_swap = 0.0
    pred_mix_conflict = jnp.zeros((), jnp.float32)
  loss = (lambda_swap * args["lambda_dis"] * loss_swap_align.mean()
          + args["lambda_dis"] * loss_dis_align.mean())
  return loss, loss_b, feat_c, pred_mix_conflict


# ----------------------------------------------------------------------------
def _run_case(B, text_out, swap_dim, mxu_dtype, tol, check_noswap):
  args = dict(q=0.7, gce="tanh", swap_epochs=1, lambda_swap=0.5, lambda_dis=1.0)
  key = jax.random.PRNGKey(0)
  ks = jax.random.split(key, 3)
  # Stand-in for BertTextEncoder(text)[:, 0, :] (CLS-token features).
  text_feat = jax.random.normal(ks[0], (B, text_out), jnp.float32)
  labels = jax.random.normal(ks[1], (B, 1), jnp.float32)
  params = init_params(ks[2], text_out=text_out, swap_dim=swap_dim)
  kparams = pack_kernel_params(params, mxu_dtype=mxu_dtype)
  perm = np.random.RandomState(0).permutation(B)

  # epoch > swap_epochs: exercises the swap (loss_swap_align) branch.
  out = text_model_forward(text_feat, labels, kparams, args, epoch=3, perm_indices=perm)
  jax.block_until_ready(out)
  ref = _ref_forward(text_feat, labels, params, args, 3, perm)
  for got, want in zip(out, ref):
    np.testing.assert_allclose(np.asarray(got), np.asarray(want), atol=tol, rtol=tol)

  if check_noswap:
    # epoch <= swap_epochs: swap half compiled out entirely.
    out0 = text_model_forward(text_feat, labels, kparams, args, epoch=0)
    jax.block_until_ready(out0)
    ref0 = _ref_forward(text_feat, labels, params, args, 0, None)
    for got, want in zip(out0, ref0):
      np.testing.assert_allclose(np.asarray(got), np.asarray(want), atol=tol, rtol=tol)


if __name__ == "__main__":
  # bf16 MXU operands (v6e/v7x-friendly), lane-dense dims; swap + warm-up epochs.
  _run_case(16, 128, 128, jnp.bfloat16, tol=5e-2, check_noswap=True)
  # f32 MXU operands, tight tolerance (structural check).
  _run_case(16, 128, 128, jnp.float32, tol=5e-3, check_noswap=False)
  # swap_dim not a multiple of 128 -> exercises the zero-padding path.
  _run_case(8, 96, 64, jnp.float32, tol=5e-3, check_noswap=False)
  print("KERNEL_OK")
</pallas_src>

<mosaic_0001>
module attributes {stable_mosaic.version = 11 : i64} {
  func.func @_text_model_kernel(%arg0: memref<16x128xbf16, #tpu.memory_space<vmem>>, %arg1: memref<16x1xf32, #tpu.memory_space<vmem>>, %arg2: memref<16x1xf32, #tpu.memory_space<vmem>>, %arg3: memref<16xi32, #tpu.memory_space<smem>>, %arg4: memref<128x256xbf16, #tpu.memory_space<vmem>>, %arg5: memref<1x256xf32, #tpu.memory_space<vmem>>, %arg6: memref<128x256xbf16, #tpu.memory_space<vmem>>, %arg7: memref<128x256xbf16, #tpu.memory_space<vmem>>, %arg8: memref<1x256xf32, #tpu.memory_space<vmem>>, %arg9: memref<1x128xf32, #tpu.memory_space<vmem>>, %arg10: memref<1x1xf32, #tpu.memory_space<vmem>>, %arg11: memref<16x128xf32, #tpu.memory_space<vmem>>, %arg12: memref<16x128xf32, #tpu.memory_space<vmem>>, %arg13: memref<16x1xf32, #tpu.memory_space<vmem>>, %arg14: memref<1x1xf32, #tpu.memory_space<vmem>>, %arg15: memref<16x256xf32, #tpu.memory_space<vmem>>, %arg16: memref<16x256xf32, #tpu.memory_space<vmem>>) attributes {dimension_semantics = [], scalar_prefetch = 0 : i64, scratch_operands = 2 : i64, tpu.core_type = #tpu.core_type<tc>} {
    %c0 = arith.constant 0 : index
    %c0_0 = arith.constant 0 : index
    %0 = vector.load %arg0[%c0, %c0_0] : memref<16x128xbf16, #tpu.memory_space<vmem>>, vector<16x128xbf16>
    %c0_1 = arith.constant 0 : index
    %c0_2 = arith.constant 0 : index
    %1 = vector.load %arg4[%c0_1, %c0_2] : memref<128x256xbf16, #tpu.memory_space<vmem>>, vector<128x256xbf16>
    %cst = arith.constant dense<0.000000e+00> : vector<16x256xf32>
    %2 = tpu.matmul %0, %1, %cst {dimension_numbers = #tpu.dot_dimension_numbers<[1], [0], [0], [1], [0, 0, 1, 1], [], []>} : vector<16x128xbf16>, vector<128x256xbf16>, vector<16x256xf32> -> vector<16x256xf32>
    %c0_3 = arith.constant 0 : index
    %c0_4 = arith.constant 0 : index
    %3 = vector.load %arg5[%c0_3, %c0_4] : memref<1x256xf32, #tpu.memory_space<vmem>>, vector<1x256xf32>
    %4 = vector.broadcast %3 : vector<1x256xf32> to vector<16x256xf32>
    %5 = arith.addf %2, %4 : vector<16x256xf32>
    %cst_5 = arith.constant 0.000000e+00 : f32
    %6 = vector.broadcast %cst_5 : f32 to vector<16x256xf32>
    %7 = arith.maximumf %5, %6 : vector<16x256xf32>
    %8 = arith.truncf %7 : vector<16x256xf32> to vector<16x256xbf16>
    %9 = vector.extract_strided_slice %8 {offsets = [0, 0], sizes = [16, 128], strides = [1, 1]} : vector<16x256xbf16> to vector<16x128xbf16>
    %10 = vector.extract_strided_slice %8 {offsets = [0, 128], sizes = [16, 128], strides = [1, 1]} : vector<16x256xbf16> to vector<16x128xbf16>
    %c0_6 = arith.constant 0 : index
    %c0_7 = arith.constant 0 : index
    %11 = vector.load %arg6[%c0_6, %c0_7] : memref<128x256xbf16, #tpu.memory_space<vmem>>, vector<128x256xbf16>
    %cst_8 = arith.constant dense<0.000000e+00> : vector<16x256xf32>
    %12 = tpu.matmul %9, %11, %cst_8 {dimension_numbers = #tpu.dot_dimension_numbers<[1], [0], [0], [1], [0, 0, 1, 1], [], []>} : vector<16x128xbf16>, vector<128x256xbf16>, vector<16x256xf32> -> vector<16x256xf32>
    %c0_9 = arith.constant 0 : index
    %c0_10 = arith.constant 0 : index
    %13 = vector.load %arg7[%c0_9, %c0_10] : memref<128x256xbf16, #tpu.memory_space<vmem>>, vector<128x256xbf16>
    %cst_11 = arith.constant dense<0.000000e+00> : vector<16x256xf32>
    %14 = tpu.matmul %10, %13, %cst_11 {dimension_numbers = #tpu.dot_dimension_numbers<[1], [0], [0], [1], [0, 0, 1, 1], [], []>} : vector<16x128xbf16>, vector<128x256xbf16>, vector<16x256xf32> -> vector<16x256xf32>
    %c0_12 = arith.constant 0 : index
    %c0_13 = arith.constant 0 : index
    %15 = vector.load %arg8[%c0_12, %c0_13] : memref<1x256xf32, #tpu.memory_space<vmem>>, vector<1x256xf32>
    %c0_14 = arith.constant 0 : index
    %c0_15 = arith.constant 0 : index
    %16 = vector.load %arg9[%c0_14, %c0_15] : memref<1x128xf32, #tpu.memory_space<vmem>>, vector<1x128xf32>
    %c0_16 = arith.constant 0 : index
    %c0_17 = arith.constant 0 : index
    %17 = vector.load %arg10[%c0_16, %c0_17] : memref<1x1xf32, #tpu.memory_space<vmem>>, vector<1x1xf32>
    %c0_18 = arith.constant 0 : index
    %c0_19 = arith.constant 0 : index
    %18 = vector.load %arg1[%c0_18, %c0_19] : memref<16x1xf32, #tpu.memory_space<vmem>>, vector<16x1xf32>
    %19 = arith.addf %12, %14 : vector<16x256xf32>
    %20 = vector.broadcast %15 : vector<1x256xf32> to vector<16x256xf32>
    %21 = arith.addf %19, %20 : vector<16x256xf32>
    %cst_20 = arith.constant 0.000000e+00 : f32
    %22 = vector.broadcast %cst_20 : f32 to vector<16x256xf32>
    %23 = arith.maximumf %21, %22 : vector<16x256xf32>
    %24 = vector.extract_strided_slice %23 {offsets = [0, 0], sizes = [16, 128], strides = [1, 1]} : vector<16x256xf32> to vector<16x128xf32>
    %c0_21 = arith.constant 0 : index
    %c0_22 = arith.constant 0 : index
    %25 = vector.load %arg11[%c0_21, %c0_22] : memref<16x128xf32, #tpu.memory_space<vmem>>, vector<16x128xf32>
    tpu.vector_store %arg11[%c0_21, %c0_22], %24 {strides = array<i32>} : memref<16x128xf32, #tpu.memory_space<vmem>>, vector<16x128xf32>,
    %26 = vector.extract_strided_slice %23 {offsets = [0, 128], sizes = [16, 128], strides = [1, 1]} : vector<16x256xf32> to vector<16x128xf32>
    %27 = vector.broadcast %16 : vector<1x128xf32> to vector<16x128xf32>
    %28 = arith.mulf %26, %27 : vector<16x128xf32>
    %cst_23 = arith.constant dense<0.000000e+00> : vector<16xf32>
    %29 = vector.multi_reduction <add>, %28, %cst_23 [1] : vector<16x128xf32> to vector<16xf32>
    %30 = vector.shape_cast %29 : vector<16xf32> to vector<16x1xf32>
    %31 = vector.broadcast %17 : vector<1x1xf32> to vector<16x1xf32>
    %32 = arith.addf %30, %31 : vector<16x1xf32>
    %33 = arith.subf %32, %18 : vector<16x1xf32>
    %34 = math.absf %33 : vector<16x1xf32>
    %c0_24 = arith.constant 0 : index
    %c0_25 = arith.constant 0 : index
    %35 = vector.load %arg13[%c0_24, %c0_25] : memref<16x1xf32, #tpu.memory_space<vmem>>, vector<16x1xf32>
    tpu.vector_store %arg13[%c0_24, %c0_25], %34 {strides = array<i32>} : memref<16x1xf32, #tpu.memory_space<vmem>>, vector<16x1xf32>,
    %cst_26 = arith.constant 1.000000e+00 : f32
    %36 = vector.broadcast %cst_26 : f32 to vector<16x1xf32>
    %37 = arith.divf %36, %34 : vector<16x1xf32>
    %cst_27 = arith.constant 0.699999988 : f32
    %38 = vector.broadcast %cst_27 : f32 to vector<16x1xf32>
    %39 = math.powf %37, %38 : vector<16x1xf32>
    %40 = math.tanh %39 : vector<16x1xf32>
    %41 = arith.mulf %40, %34 : vector<16x1xf32>
    %cst_28 = arith.constant dense<0.000000e+00> : vector<1xf32>
    %42 = vector.multi_reduction <add>, %41, %cst_28 [0] : vector<16x1xf32> to vector<1xf32>
    %43 = vector.shape_cast %42 : vector<1xf32> to vector<1x1xf32>
    %cst_29 = arith.constant 6.250000e-02 : f32
    %44 = vector.broadcast %cst_29 : f32 to vector<1x1xf32>
    %45 = arith.mulf %43, %44 : vector<1x1xf32>
    %c0_30 = arith.constant 0 : index
    %c0_31 = arith.constant 0 : index
    %46 = vector.load %arg15[%c0_30, %c0_31] : memref<16x256xf32, #tpu.memory_space<vmem>>, vector<16x256xf32>
    tpu.vector_store %arg15[%c0_30, %c0_31], %14 {strides = array<i32>} : memref<16x256xf32, #tpu.memory_space<vmem>>, vector<16x256xf32>,
    %c0_i32 = arith.constant 0 : i32
    %c16_i32 = arith.constant 16 : i32
    %47 = arith.addi %c0_i32, %c16_i32 : i32
    %c1_i32 = arith.constant 1 : i32
    scf.for %arg17 = %c0_i32 to %47 step %c1_i32  : i32 {
      %c1_i32_49 = arith.constant 1 : i32
      %82 = arith.muli %arg17, %c1_i32_49 : i32
      %c0_i32_50 = arith.constant 0 : i32
      %83 = arith.addi %c0_i32_50, %82 : i32
      %84 = arith.index_cast %83 : i32 to index
      %85 = memref.load %arg3[%84] : memref<16xi32, #tpu.memory_space<smem>>
      %86 = arith.index_cast %85 : i32 to index
      %c0_51 = arith.constant 0 : index
      %87 = vector.load %arg15[%86, %c0_51] : memref<16x256xf32, #tpu.memory_space<vmem>>, vector<1x256xf32>
      %88 = arith.index_cast %83 : i32 to index
      %c0_52 = arith.constant 0 : index
      %89 = vector.load %arg16[%88, %c0_52] : memref<16x256xf32, #tpu.memory_space<vmem>>, vector<1x256xf32>
      tpu.vector_store %arg16[%88, %c0_52], %87 {strides = array<i32>} : memref<16x256xf32, #tpu.memory_space<vmem>>, vector<1x256xf32>,
    }
    %c16_i32_32 = arith.constant 16 : i32
    %c0_33 = arith.constant 0 : index
    %c0_34 = arith.constant 0 : index
    %48 = vector.load %arg16[%c0_33, %c0_34] : memref<16x256xf32, #tpu.memory_space<vmem>>, vector<16x256xf32>
    %49 = arith.addf %12, %48 : vector<16x256xf32>
    %50 = vector.broadcast %15 : vector<1x256xf32> to vector<16x256xf32>
    %51 = arith.addf %49, %50 : vector<16x256xf32>
    %cst_35 = arith.constant 0.000000e+00 : f32
    %52 = vector.broadcast %cst_35 : f32 to vector<16x256xf32>
    %53 = arith.maximumf %51, %52 : vector<16x256xf32>
    %54 = vector.extract_strided_slice %53 {offsets = [0, 0], sizes = [16, 128], strides = [1, 1]} : vector<16x256xf32> to vector<16x128xf32>
    %c0_36 = arith.constant 0 : index
    %c0_37 = arith.constant 0 : index
    %55 = vector.load %arg12[%c0_36, %c0_37] : memref<16x128xf32, #tpu.memory_space<vmem>>, vector<16x128xf32>
    tpu.vector_store %arg12[%c0_36, %c0_37], %54 {strides = array<i32>} : memref<16x128xf32, #tpu.memory_space<vmem>>, vector<16x128xf32>,
    %56 = vector.extract_strided_slice %53 {offsets = [0, 128], sizes = [16, 128], strides = [1, 1]} : vector<16x256xf32> to vector<16x128xf32>
    %57 = vector.broadcast %16 : vector<1x128xf32> to vector<16x128xf32>
    %58 = arith.mulf %56, %57 : vector<16x128xf32>
    %cst_38 = arith.constant dense<0.000000e+00> : vector<16xf32>
    %59 = vector.multi_reduction <add>, %58, %cst_38 [1] : vector<16x128xf32> to vector<16xf32>
    %60 = vector.shape_cast %59 : vector<16xf32> to vector<16x1xf32>
    %61 = vector.broadcast %17 : vector<1x1xf32> to vector<16x1xf32>
    %62 = arith.addf %60, %61 : vector<16x1xf32>
    %c0_39 = arith.constant 0 : index
    %c0_40 = arith.constant 0 : index
    %63 = vector.load %arg2[%c0_39, %c0_40] : memref<16x1xf32, #tpu.memory_space<vmem>>, vector<16x1xf32>
    %64 = arith.subf %62, %63 : vector<16x1xf32>
    %65 = math.absf %64 : vector<16x1xf32>
    %cst_41 = arith.constant 1.000000e+00 : f32
    %66 = vector.broadcast %cst_41 : f32 to vector<16x1xf32>
    %67 = arith.divf %66, %65 : vector<16x1xf32>
    %cst_42 = arith.constant 0.699999988 : f32
    %68 = vector.broadcast %cst_42 : f32 to vector<16x1xf32>
    %69 = math.powf %67, %68 : vector<16x1xf32>
    %70 = math.tanh %69 : vector<16x1xf32>
    %71 = arith.mulf %70, %65 : vector<16x1xf32>
    %cst_43 = arith.constant dense<0.000000e+00> : vector<1xf32>
    %72 = vector.multi_reduction <add>, %71, %cst_43 [0] : vector<16x1xf32> to vector<1xf32>
    %73 = vector.shape_cast %72 : vector<1xf32> to vector<1x1xf32>
    %cst_44 = arith.constant 6.250000e-02 : f32
    %74 = vector.broadcast %cst_44 : f32 to vector<1x1xf32>
    %75 = arith.mulf %73, %74 : vector<1x1xf32>
    %cst_45 = arith.constant 5.000000e-01 : f32
    %76 = vector.broadcast %cst_45 : f32 to vector<1x1xf32>
    %77 = arith.mulf %76, %75 : vector<1x1xf32>
    %cst_46 = arith.constant 1.000000e+00 : f32
    %78 = vector.broadcast %cst_46 : f32 to vector<1x1xf32>
    %79 = arith.mulf %78, %45 : vector<1x1xf32>
    %80 = arith.addf %77, %79 : vector<1x1xf32>
    %c0_47 = arith.constant 0 : index
    %c0_48 = arith.constant 0 : index
    %81 = vector.load %arg14[%c0_47, %c0_48] : memref<1x1xf32, #tpu.memory_space<vmem>>, vector<1x1xf32>
    tpu.vector_store %arg14[%c0_47, %c0_48], %80 {strides = array<i32>} : memref<1x1xf32, #tpu.memory_space<vmem>>, vector<1x1xf32>,
    return
  }
}

</mosaic_0001>

<llo_original>
// kernel: tpu_custom_call.1
$region0: #{tpu_custom_call.1}
  #allocation0 [shape = 'u32[]', space=smem, size = 0x4, offset = 0x4, fixed_abs, tag = 'smem constant byte address 0x4 - core index']
  #allocation1 [shape = 'u32[144,128]{1,0:T(1,128)}', space=vmem, size = 0x12000, scoped, tag = 'internal scratch']
  #allocation2 [shape = 'f32[16,256]{1,0:T(8,128)}', space=vmem, size = 0x4000, scoped, tag = 'scratch operand']
  #allocation3 [shape = 'f32[16,256]{1,0:T(8,128)}', space=vmem, size = 0x4000, scoped, tag = 'scratch operand']
  #allocation4 [shape = 'f32[1,1]{1,0:T(1,128)S(1)}', space=vmem, size = 0x200, scoped, tag = 'scoped memory for tpu_custom_call.1']
  %s0 = inlined_call_operand.vmem [shape: bf16[16,128], index: 0, kind: input, shape index: {}]
  %s1 = inlined_call_operand.vmem [shape: f32[16,1], index: 1, kind: input, shape index: {}]
  %s2 = inlined_call_operand.vmem [shape: f32[16,1], index: 2, kind: input, shape index: {}]
  %s3 = inlined_call_operand.vmem [shape: s32[16], index: 3, kind: input, shape index: {}]
  %s4 = inlined_call_operand.hbm [shape: bf16[128,256], index: 4, kind: input, shape index: {}]
  %s5 = inlined_call_operand.vmem [shape: f32[1,256], index: 5, kind: input, shape index: {}]
  %s6 = inlined_call_operand.hbm [shape: bf16[128,256], index: 6, kind: input, shape index: {}]
  %s7 = inlined_call_operand.hbm [shape: bf16[128,256], index: 7, kind: input, shape index: {}]
  %s8 = inlined_call_operand.vmem [shape: f32[1,256], index: 8, kind: input, shape index: {}]
  %s9 = inlined_call_operand.vmem [shape: f32[1,128], index: 9, kind: input, shape index: {}]
  %s10 = inlined_call_operand.<no memory space> [shape: f32[1,1], index: 10, kind: input, shape index: {}]
  %s11 = inlined_call_operand.hbm [shape: f32[16,128], index: 11, kind: output, shape index: {0}]
  %s12 = inlined_call_operand.hbm [shape: f32[16,128], index: 12, kind: output, shape index: {1}]
  %s13 = inlined_call_operand.vmem [shape: f32[16,1], index: 13, kind: output, shape index: {2}]
  %s14 = inlined_call_operand.hbm [shape: f32[1,1], index: 14, kind: output, shape index: {3}]
  %15 = xla_tuple %s11, %s12, %s13, %s14
  %s16 = sld [smem:[#allocation0]]
  $region101: #{tpu_custom_call.1} parent=0
    _
  %s18 = ssub.s32 1, %s16
  %s19 = scalar_select 0, %s18, %s16
  %v20 = vstv %s10
  %21 = vst [vmem:[#allocation4] sm:$0x1] %v20
  $region1: #{tpu_custom_call.1} parent=0
    #allocation5 [shape = 'u8[512]{0}', space=smem, size = 0x200, scoped, tag = 'input window, operand 3, single buffered']
    #allocation6 [shape = 's32[1]{0}', space=sflag, size = 0x4, scoped, tag = 'scoped memory for tpu_custom_call.1']
    #allocation7 [shape = 's32[1]{0}', space=sflag, size = 0x4, scoped, tag = 'scoped memory for tpu_custom_call.1']
    #allocation8 [shape = 's32[1]{0}', space=sflag, size = 0x4, scoped, tag = 'scoped memory for tpu_custom_call.1']
    #allocation9 [shape = 'u8[65536]{0}', space=vmem, size = 0x10000, scoped, tag = 'input window, operand 4, single buffered']
    #allocation10 [shape = 'u8[65536]{0}', space=vmem, size = 0x10000, scoped, tag = 'input window, operand 6, single buffered']
    #allocation11 [shape = 's32[1]{0}', space=sflag, size = 0x4, scoped, tag = 'scoped memory for tpu_custom_call.1']
    #allocation12 [shape = 'u8[65536]{0}', space=vmem, size = 0x10000, scoped, tag = 'input window, operand 7, single buffered']
    #allocation13 [shape = 'u8[8192]{0}', space=vmem, size = 0x2000, scoped, tag = 'output window, operand 0, single buffered']
    #allocation14 [shape = 'u8[8192]{0}', space=vmem, size = 0x2000, scoped, tag = 'output window, operand 1, single buffered']
    #allocation15 [shape = 's32[1]{0}', space=sflag, size = 0x4, scoped, tag = 'scoped memory for tpu_custom_call.1']
    #allocation16 [shape = 'u8[512]{0}', space=vmem, size = 0x400, scoped, tag = 'output window, operand 3, single buffered']
    %22 = vsyncpa [#allocation8], 0
    %23 = vsyncpa [#allocation6], 0
    %24 = vsyncpa [#allocation11], 0
    %25 = vsyncpa [#allocation7], 0
    %26 = vsyncpa [#allocation15], 0
    // Predicated region
    $region2: #{tpu_custom_call.1} parent=1 // pred_check
      _
    $region3: #{tpu_custom_call.1} parent=1 // pred_check_branch
      %28 = sbr.rel (0) target = $region5
    $region4: #{tpu_custom_call.1} parent=1 // pred_region
      _
    $region5: #{tpu_custom_call.1} parent=1 // pred_fallthru
      _
    // Predicated region
    $region6: #{tpu_custom_call.1} parent=1 // pred_check
      _
    $region7: #{tpu_custom_call.1} parent=1 // pred_check_branch
      %30 = sbr.rel (0) target = $region9
    $region8: #{tpu_custom_call.1} parent=1 // pred_region
      _
    $region9: #{tpu_custom_call.1} parent=1 // pred_fallthru
      _
    // Predicated region
    $region10: #{tpu_custom_call.1} parent=1 // pred_check
      _
    $region11: #{tpu_custom_call.1} parent=1 // pred_check_branch
      %32 = sbr.rel (0) target = $region13
    $region12: #{tpu_custom_call.1} parent=1 // pred_region
      _
    $region13: #{tpu_custom_call.1} parent=1 // pred_fallthru
      _
    // Predicated region
    $region14: #{tpu_custom_call.1} parent=1 // pred_check
      _
    $region15: #{tpu_custom_call.1} parent=1 // pred_check_branch
      %34 = sbr.rel (0) target = $region17
    $region16: #{tpu_custom_call.1} parent=1 // pred_region
      %s36 = ssub.s32 16, 16
      %37 = vsyncadd [#allocation8], %s36
      %s39 = sshll.u32 %s3, 4
      %s40 = int_to_ptr.vmem [resolvable:$true] %s39
      %42 = dma.vmem_to_smem %s40, 16, [#allocation5], [#allocation8]
    $region17: #{tpu_custom_call.1} parent=1 // pred_fallthru
      _
    // Predicated region
    $region18: #{tpu_custom_call.1} parent=1 // pred_check
      _
    $region19: #{tpu_custom_call.1} parent=1 // pred_check_branch
      %44 = sbr.rel (0) target = $region21
    $region20: #{tpu_custom_call.1} parent=1 // pred_region
      %s46 = ssub.s32 2048, 2048
      %47 = vsyncadd [#allocation6], %s46
      %s48 = sshll.u32 [#allocation9], 4
      %s49 = int_to_ptr.vmem [resolvable:$true] %s48
      %54 = dma.hbm_to_vmem [thread:$0]  %s4, 2048, %s49, [#allocation6], 128, 128, 8
    $region21: #{tpu_custom_call.1} parent=1 // pred_fallthru
      _
    // Predicated region
    $region22: #{tpu_custom_call.1} parent=1 // pred_check
      _
    $region23: #{tpu_custom_call.1} parent=1 // pred_check_branch
      %56 = sbr.rel (0) target = $region25
    $region24: #{tpu_custom_call.1} parent=1 // pred_region
      _
    $region25: #{tpu_custom_call.1} parent=1 // pred_fallthru
      _
    // Predicated region
    $region26: #{tpu_custom_call.1} parent=1 // pred_check
      _
    $region27: #{tpu_custom_call.1} parent=1 // pred_check_branch
      %58 = sbr.rel (0) target = $region29
    $region28: #{tpu_custom_call.1} parent=1 // pred_region
      %s60 = ssub.s32 2048, 2048
      %61 = vsyncadd [#allocation11], %s60
      %s62 = sshll.u32 [#allocation10], 4
      %s63 = int_to_ptr.vmem [resolvable:$true] %s62
      %68 = dma.hbm_to_vmem [thread:$0]  %s6, 2048, %s63, [#allocation11], 128, 128, 8
    $region29: #{tpu_custom_call.1} parent=1 // pred_fallthru
      _
    // Predicated region
    $region30: #{tpu_custom_call.1} parent=1 // pred_check
      _
    $region31: #{tpu_custom_call.1} parent=1 // pred_check_branch
      %70 = sbr.rel (0) target = $region33
    $region32: #{tpu_custom_call.1} parent=1 // pred_region
      %s72 = ssub.s32 2048, 2048
      %73 = vsyncadd [#allocation11], %s72
      %s74 = sshll.u32 [#allocation12], 4
      %s75 = int_to_ptr.vmem [resolvable:$true] %s74
      %80 = dma.hbm_to_vmem [thread:$0]  %s7, 2048, %s75, [#allocation11], 128, 128, 8
    $region33: #{tpu_custom_call.1} parent=1 // pred_fallthru
      _
    // Predicated region
    $region34: #{tpu_custom_call.1} parent=1 // pred_check
      _
    $region35: #{tpu_custom_call.1} parent=1 // pred_check_branch
      %82 = sbr.rel (0) target = $region37
    $region36: #{tpu_custom_call.1} parent=1 // pred_region
      _
    $region37: #{tpu_custom_call.1} parent=1 // pred_fallthru
      _
    // Predicated region
    $region38: #{tpu_custom_call.1} parent=1 // pred_check
      _
    $region39: #{tpu_custom_call.1} parent=1 // pred_check_branch
      %84 = sbr.rel (0) target = $region41
    $region40: #{tpu_custom_call.1} parent=1 // pred_region
      _
    $region41: #{tpu_custom_call.1} parent=1 // pred_fallthru
      _
    // Predicated region
    $region42: #{tpu_custom_call.1} parent=1 // pred_check
      _
    $region43: #{tpu_custom_call.1} parent=1 // pred_check_branch
      %86 = sbr.rel (0) target = $region45
    $region44: #{tpu_custom_call.1} parent=1 // pred_region
      _
    $region45: #{tpu_custom_call.1} parent=1 // pred_fallthru
      _
    // Predicated region
    $region46: #{tpu_custom_call.1} parent=1 // pred_check
      _
    $region47: #{tpu_custom_call.1} parent=1 // pred_check_branch
      %88 = sbr.rel (0) target = $region49
    $region48: #{tpu_custom_call.1} parent=1 // pred_region
      %89 = dma.done [#allocation8], 16
    $region49: #{tpu_custom_call.1} parent=1 // pred_fallthru
      _
    // Predicated region
    $region50: #{tpu_custom_call.1} parent=1 // pred_check
      _
    $region51: #{tpu_custom_call.1} parent=1 // pred_check_branch
      %91 = sbr.rel (0) target = $region53
    $region52: #{tpu_custom_call.1} parent=1 // pred_region
      %92 = dma.done [#allocation6], 2048
    $region53: #{tpu_custom_call.1} parent=1 // pred_fallthru
      _
    // Predicated region
    $region54: #{tpu_custom_call.1} parent=1 // pred_check
      _
    $region55: #{tpu_custom_call.1} parent=1 // pred_check_branch
      %94 = sbr.rel (0) target = $region57
    $region56: #{tpu_custom_call.1} parent=1 // pred_region
      %95 = dma.done [#allocation11], 2048
    $region57: #{tpu_custom_call.1} parent=1 // pred_fallthru
      _
    // Predicated region
    $region58: #{tpu_custom_call.1} parent=1 // pred_check
      _
    $region59: #{tpu_custom_call.1} parent=1 // pred_check_branch
      %97 = sbr.rel (0) target = $region61
    $region60: #{tpu_custom_call.1} parent=1 // pred_region
      %98 = dma.done [#allocation11], 2048
    $region61: #{tpu_custom_call.1} parent=1 // pred_fallthru
      _
    %99 = sfence
    %v101 = vld [vmem:[%s0] sm:$0xf]
    %v102 = vld [vmem:[%s0 + $0x4] sm:$0xf]
    %v103 = vld [vmem:[#allocation9] sm:$0xff]
    %v104 = vld [vmem:[#allocation9 + $0x8] sm:$0xff]
    %v105 = vld [vmem:[#allocation9 + $0x10] sm:$0xff]
    %v106 = vld [vmem:[#allocation9 + $0x18] sm:$0xff]
    %v107 = vld [vmem:[#allocation9 + $0x20] sm:$0xff]
    %v108 = vld [vmem:[#allocation9 + $0x28] sm:$0xff]
    %v109 = vld [vmem:[#allocation9 + $0x30] sm:$0xff]
    %v110 = vld [vmem:[#allocation9 + $0x38] sm:$0xff]
    %v111 = vld [vmem:[#allocation9 + $0x40] sm:$0xff]
    %v112 = vld [vmem:[#allocation9 + $0x48] sm:$0xff]
    %v113 = vld [vmem:[#allocation9 + $0x50] sm:$0xff]
    %v114 = vld [vmem:[#allocation9 + $0x58] sm:$0xff]
    %v115 = vld [vmem:[#allocation9 + $0x60] sm:$0xff]
    %v116 = vld [vmem:[#allocation9 + $0x68] sm:$0xff]
    %v117 = vld [vmem:[#allocation9 + $0x70] sm:$0xff]
    %v118 = vld [vmem:[#allocation9 + $0x78] sm:$0xff]
    %v119 = vld [vmem:[%s5] sm:$0x3]
    %v121 = vlaneseq
    %v122 = vshrl.u32 %v121, 7
    %v123 = vsub.s32 0, %v122
    %v124 = vrot.slane %v119, %v123
    %v125 = vlaneseq
    %v126 = vshrl.u32 %v125, 7
    %v127 = vsub.s32 1, %v126
    %v128 = vrot.slane %v119, %v127
    %v133 = vunpack.c.l.b16 %v101
    %v134 = vunpack.c.l.b16 %v102
    %v135 = vpack.c.b16 %v134, %v133
    %v153 = vunpack.c.l.b16 %v103
    %v154 = vunpack.c.h.b16 %v103
    %v155 = vunpack.c.l.b16 %v104
    %v156 = vunpack.c.h.b16 %v104
    %v157 = vunpack.c.l.b16 %v105
    %v158 = vunpack.c.h.b16 %v105
    %v159 = vunpack.c.l.b16 %v106
    %v160 = vunpack.c.h.b16 %v106
    %v161 = vunpack.c.l.b16 %v107
    %v162 = vunpack.c.h.b16 %v107
    %v163 = vunpack.c.l.b16 %v108
    %v164 = vunpack.c.h.b16 %v108
    %v165 = vunpack.c.l.b16 %v109
    %v166 = vunpack.c.h.b16 %v109
    %v167 = vunpack.c.l.b16 %v110
    %v168 = vunpack.c.h.b16 %v110
    %v169 = vunpack.c.l.b16 %v111
    %v170 = vunpack.c.h.b16 %v111
    %v171 = vunpack.c.l.b16 %v112
    %v172 = vunpack.c.h.b16 %v112
    %v173 = vunpack.c.l.b16 %v113
    %v174 = vunpack.c.h.b16 %v113
    %v175 = vunpack.c.l.b16 %v114
    %v176 = vunpack.c.h.b16 %v114
    %v177 = vunpack.c.l.b16 %v115
    %v178 = vunpack.c.h.b16 %v115
    %v179 = vunpack.c.l.b16 %v116
    %v180 = vunpack.c.h.b16 %v116
    %v181 = vunpack.c.l.b16 %v117
    %v182 = vunpack.c.h.b16 %v117
    %v183 = vunpack.c.l.b16 %v118
    %v184 = vunpack.c.h.b16 %v118
    %v185 = vpack.c.b16 %v155, %v153
    %v186 = vpack.c.b16 %v156, %v154
    %v187 = vpack.c.b16 %v159, %v157
    %v188 = vpack.c.b16 %v160, %v158
    %v189 = vpack.c.b16 %v163, %v161
    %v190 = vpack.c.b16 %v164, %v162
    %v191 = vpack.c.b16 %v167, %v165
    %v192 = vpack.c.b16 %v168, %v166
    %v193 = vpack.c.b16 %v171, %v169
    %v194 = vpack.c.b16 %v172, %v170
    %v195 = vpack.c.b16 %v175, %v173
    %v196 = vpack.c.b16 %v176, %v174
    %v197 = vpack.c.b16 %v179, %v177
    %v198 = vpack.c.b16 %v180, %v178
    %v199 = vpack.c.b16 %v183, %v181
    %v200 = vpack.c.b16 %v184, %v182
    %217 = vmatprep.subr.bf16.mxu0 %v186
    %218 = vmatpush1.bf16.msra.mxu0 %v185
    %219 = vmatprep.subr.bf16.mxu0 %v188
    %220 = vmatpush1.bf16.msra.mxu0 %v187
    %221 = vmatprep.subr.bf16.mxu0 %v190
    %222 = vmatpush1.bf16.msra.mxu0 %v189
    %223 = vmatprep.subr.bf16.mxu0 %v192
    %224 = vmatpush1.bf16.msra.mxu0 %v191
    %225 = vmatprep.subr.bf16.mxu0 %v194
    %226 = vmatpush1.bf16.msra.mxu0 %v193
    %227 = vmatprep.subr.bf16.mxu0 %v196
    %228 = vmatpush1.bf16.msra.mxu0 %v195
    %229 = vmatprep.subr.bf16.mxu0 %v198
    %230 = vmatpush1.bf16.msra.mxu0 %v197
    %231 = vmatprep.subr.bf16.mxu0 %v200
    %232 = vmatpush1.bf16.msra.mxu0 %v199
    %233 = vmatprep.subr.bf16.mxu0 0
    %234 = vmatpush1.bf16.msra.mxu0 0
    %235 = vmatprep.subr.bf16.mxu0 0
    %236 = vmatpush1.bf16.msra.mxu0 0
    %237 = vmatprep.subr.bf16.mxu0 0
    %238 = vmatpush1.bf16.msra.mxu0 0
    %239 = vmatprep.subr.bf16.mxu0 0
    %240 = vmatpush1.bf16.msra.mxu0 0
    %241 = vmatprep.subr.bf16.mxu0 0
    %242 = vmatpush1.bf16.msra.mxu0 0
    %243 = vmatprep.subr.bf16.mxu0 0
    %244 = vmatpush1.bf16.msra.mxu0 0
    %245 = vmatprep.subr.bf16.mxu0 0
    %246 = vmatpush1.bf16.msra.mxu0 0
    %247 = vmatprep.subr.bf16.mxu0 0
    %248 = vmatpush1.bf16.msra.mxu0 0
    %249 = vmatprep.mubr.bf16.mxu0 0
    %250 = vmatmul.mubr.bf16.gmra.mrb[0].mxu0 %v135
    %v251 = vpop.f32.mrb[0].mxu0
    %v252 = vadd.f32 %v124, %v251
    %v253 = vpop.f32.mrb[0].mxu0
    %v254 = vadd.f32 %v128, %v253
    %v255 = vpop.f32.mrb[0].mxu0
    %v256 = vadd.f32 %v124, %v255
    %v257 = vpop.f32.mrb[0].mxu0
    %v258 = vadd.f32 %v128, %v257
    %259 = vdwg.mxu0
    %v260 = vmax.f32 %v252, 0.0
    %v261 = vmax.f32 %v254, 0.0
    %v262 = vmax.f32 %v256, 0.0
    %v263 = vmax.f32 %v258, 0.0
    %v264 = vpack.c.bf16 %v262, %v260
    %v265 = vpack.c.bf16 %v263, %v261
    %v266 = vld [vmem:[#allocation10] sm:$0xff]
    %v267 = vld [vmem:[#allocation10 + $0x8] sm:$0xff]
    %v268 = vld [vmem:[#allocation10 + $0x10] sm:$0xff]
    %v269 = vld [vmem:[#allocation10 + $0x18] sm:$0xff]
    %v270 = vld [vmem:[#allocation10 + $0x20] sm:$0xff]
    %v271 = vld [vmem:[#allocation10 + $0x28] sm:$0xff]
    %v272 = vld [vmem:[#allocation10 + $0x30] sm:$0xff]
    %v273 = vld [vmem:[#allocation10 + $0x38] sm:$0xff]
    %v274 = vld [vmem:[#allocation10 + $0x40] sm:$0xff]
    %v275 = vld [vmem:[#allocation10 + $0x48] sm:$0xff]
    %v276 = vld [vmem:[#allocation10 + $0x50] sm:$0xff]
    %v277 = vld [vmem:[#allocation10 + $0x58] sm:$0xff]
    %v278 = vld [vmem:[#allocation10 + $0x60] sm:$0xff]
    %v279 = vld [vmem:[#allocation10 + $0x68] sm:$0xff]
    %v280 = vld [vmem:[#allocation10 + $0x70] sm:$0xff]
    %v281 = vld [vmem:[#allocation10 + $0x78] sm:$0xff]
    %v298 = vunpack.c.l.b16 %v266
    %v299 = vunpack.c.h.b16 %v266
    %v300 = vunpack.c.l.b16 %v267
    %v301 = vunpack.c.h.b16 %v267
    %v302 = vunpack.c.l.b16 %v268
    %v303 = vunpack.c.h.b16 %v268
    %v304 = vunpack.c.l.b16 %v269
    %v305 = vunpack.c.h.b16 %v269
    %v306 = vunpack.c.l.b16 %v270
    %v307 = vunpack.c.h.b16 %v270
    %v308 = vunpack.c.l.b16 %v271
    %v309 = vunpack.c.h.b16 %v271
    %v310 = vunpack.c.l.b16 %v272
    %v311 = vunpack.c.h.b16 %v272
    %v312 = vunpack.c.l.b16 %v273
    %v313 = vunpack.c.h.b16 %v273
    %v314 = vunpack.c.l.b16 %v274
    %v315 = vunpack.c.h.b16 %v274
    %v316 = vunpack.c.l.b16 %v275
    %v317 = vunpack.c.h.b16 %v275
    %v318 = vunpack.c.l.b16 %v276
    %v319 = vunpack.c.h.b16 %v276
    %v320 = vunpack.c.l.b16 %v277
    %v321 = vunpack.c.h.b16 %v277
    %v322 = vunpack.c.l.b16 %v278
    %v323 = vunpack.c.h.b16 %v278
    %v324 = vunpack.c.l.b16 %v279
    %v325 = vunpack.c.h.b16 %v279
    %v326 = vunpack.c.l.b16 %v280
    %v327 = vunpack.c.h.b16 %v280
    %v328 = vunpack.c.l.b16 %v281
    %v329 = vunpack.c.h.b16 %v281
    %v330 = vpack.c.b16 %v300, %v298
    %v331 = vpack.c.b16 %v301, %v299
    %v332 = vpack.c.b16 %v304, %v302
    %v333 = vpack.c.b16 %v305, %v303
    %v334 = vpack.c.b16 %v308, %v306
    %v335 = vpack.c.b16 %v309, %v307
    %v336 = vpack.c.b16 %v312, %v310
    %v337 = vpack.c.b16 %v313, %v311
    %v338 = vpack.c.b16 %v316, %v314
    %v339 = vpack.c.b16 %v317, %v315
    %v340 = vpack.c.b16 %v320, %v318
    %v341 = vpack.c.b16 %v321, %v319
    %v342 = vpack.c.b16 %v324, %v322
    %v343 = vpack.c.b16 %v325, %v323
    %v344 = vpack.c.b16 %v328, %v326
    %v345 = vpack.c.b16 %v329, %v327
    %362 = vmatprep.subr.bf16.mxu0 %v331
    %363 = vmatpush1.bf16.msra.mxu0 %v330
    %364 = vmatprep.subr.bf16.mxu0 %v333
    %365 = vmatpush1.bf16.msra.mxu0 %v332
    %366 = vmatprep.subr.bf16.mxu0 %v335
    %367 = vmatpush1.bf16.msra.mxu0 %v334
    %368 = vmatprep.subr.bf16.mxu0 %v337
    %369 = vmatpush1.bf16.msra.mxu0 %v336
    %370 = vmatprep.subr.bf16.mxu0 %v339
    %371 = vmatpush1.bf16.msra.mxu0 %v338
    %372 = vmatprep.subr.bf16.mxu0 %v341
    %373 = vmatpush1.bf16.msra.mxu0 %v340
    %374 = vmatprep.subr.bf16.mxu0 %v343
    %375 = vmatpush1.bf16.msra.mxu0 %v342
    %376 = vmatprep.subr.bf16.mxu0 %v345
    %377 = vmatpush1.bf16.msra.mxu0 %v344
    %378 = vmatprep.subr.bf16.mxu0 0
    %379 = vmatpush1.bf16.msra.mxu0 0
    %380 = vmatprep.subr.bf16.mxu0 0
    %381 = vmatpush1.bf16.msra.mxu0 0
    %382 = vmatprep.subr.bf16.mxu0 0
    %383 = vmatpush1.bf16.msra.mxu0 0
    %384 = vmatprep.subr.bf16.mxu0 0
    %385 = vmatpush1.bf16.msra.mxu0 0
    %386 = vmatprep.subr.bf16.mxu0 0
    %387 = vmatpush1.bf16.msra.mxu0 0
    %388 = vmatprep.subr.bf16.mxu0 0
    %389 = vmatpush1.bf16.msra.mxu0 0
    %390 = vmatprep.subr.bf16.mxu0 0
    %391 = vmatpush1.bf16.msra.mxu0 0
    %392 = vmatprep.subr.bf16.mxu0 0
    %393 = vmatpush1.bf16.msra.mxu0 0
    %394 = vmatprep.mubr.bf16.mxu0 0
    %395 = vmatmul.mubr.bf16.gmra.mrb[0].mxu0 %v264
    %v396 = vpop.f32.mrb[0].mxu0
    %v397 = vadd.f32 0.0, %v396
    %v398 = vpop.f32.mrb[0].mxu0
    %v399 = vadd.f32 0.0, %v398
    %v400 = vpop.f32.mrb[0].mxu0
    %v401 = vadd.f32 0.0, %v400
    %v402 = vpop.f32.mrb[0].mxu0
    %v403 = vadd.f32 0.0, %v402
    %404 = vdwg.mxu0
    %v405 = vld [vmem:[#allocation12] sm:$0xff]
    %v406 = vld [vmem:[#allocation12 + $0x8] sm:$0xff]
    %v407 = vld [vmem:[#allocation12 + $0x10] sm:$0xff]
    %v408 = vld [vmem:[#allocation12 + $0x18] sm:$0xff]
    %v409 = vld [vmem:[#allocation12 + $0x20] sm:$0xff]
    %v410 = vld [vmem:[#allocation12 + $0x28] sm:$0xff]
    %v411 = vld [vmem:[#allocation12 + $0x30] sm:$0xff]
    %v412 = vld [vmem:[#allocation12 + $0x38] sm:$0xff]
    %v413 = vld [vmem:[#allocation12 + $0x40] sm:$0xff]
    %v414 = vld [vmem:[#allocation12 + $0x48] sm:$0xff]
    %v415 = vld [vmem:[#allocation12 + $0x50] sm:$0xff]
    %v416 = vld [vmem:[#allocation12 + $0x58] sm:$0xff]
    %v417 = vld [vmem:[#allocation12 + $0x60] sm:$0xff]
    %v418 = vld [vmem:[#allocation12 + $0x68] sm:$0xff]
    %v419 = vld [vmem:[#allocation12 + $0x70] sm:$0xff]
    %v420 = vld [vmem:[#allocation12 + $0x78] sm:$0xff]
    %v437 = vunpack.c.l.b16 %v405
    %v438 = vunpack.c.h.b16 %v405
    %v439 = vunpack.c.l.b16 %v406
    %v440 = vunpack.c.h.b16 %v406
    %v441 = vunpack.c.l.b16 %v407
    %v442 = vunpack.c.h.b16 %v407
    %v443 = vunpack.c.l.b16 %v408
    %v444 = vunpack.c.h.b16 %v408
    %v445 = vunpack.c.l.b16 %v409
    %v446 = vunpack.c.h.b16 %v409
    %v447 = vunpack.c.l.b16 %v410
    %v448 = vunpack.c.h.b16 %v410
    %v449 = vunpack.c.l.b16 %v411
    %v450 = vunpack.c.h.b16 %v411
    %v451 = vunpack.c.l.b16 %v412
    %v452 = vunpack.c.h.b16 %v412
    %v453 = vunpack.c.l.b16 %v413
    %v454 = vunpack.c.h.b16 %v413
    %v455 = vunpack.c.l.b16 %v414
    %v456 = vunpack.c.h.b16 %v414
    %v457 = vunpack.c.l.b16 %v415
    %v458 = vunpack.c.h.b16 %v415
    %v459 = vunpack.c.l.b16 %v416
    %v460 = vunpack.c.h.b16 %v416
    %v461 = vunpack.c.l.b16 %v417
    %v462 = vunpack.c.h.b16 %v417
    %v463 = vunpack.c.l.b16 %v418
    %v464 = vunpack.c.h.b16 %v418
    %v465 = vunpack.c.l.b16 %v419
    %v466 = vunpack.c.h.b16 %v419
    %v467 = vunpack.c.l.b16 %v420
    %v468 = vunpack.c.h.b16 %v420
    %v469 = vpack.c.b16 %v439, %v437
    %v470 = vpack.c.b16 %v440, %v438
    %v471 = vpack.c.b16 %v443, %v441
    %v472 = vpack.c.b16 %v444, %v442
    %v473 = vpack.c.b16 %v447, %v445
    %v474 = vpack.c.b16 %v448, %v446
    %v475 = vpack.c.b16 %v451, %v449
    %v476 = vpack.c.b16 %v452, %v450
    %v477 = vpack.c.b16 %v455, %v453
    %v478 = vpack.c.b16 %v456, %v454
    %v479 = vpack.c.b16 %v459, %v457
    %v480 = vpack.c.b16 %v460, %v458
    %v481 = vpack.c.b16 %v463, %v461
    %v482 = vpack.c.b16 %v464, %v462
    %v483 = vpack.c.b16 %v467, %v465
    %v484 = vpack.c.b16 %v468, %v466
    %501 = vmatprep.subr.bf16.mxu0 %v470
    %502 = vmatpush1.bf16.msra.mxu0 %v469
    %503 = vmatprep.subr.bf16.mxu0 %v472
    %504 = vmatpush1.bf16.msra.mxu0 %v471
    %505 = vmatprep.subr.bf16.mxu0 %v474
    %506 = vmatpush1.bf16.msra.mxu0 %v473
    %507 = vmatprep.subr.bf16.mxu0 %v476
    %508 = vmatpush1.bf16.msra.mxu0 %v475
    %509 = vmatprep.subr.bf16.mxu0 %v478
    %510 = vmatpush1.bf16.msra.mxu0 %v477
    %511 = vmatprep.subr.bf16.mxu0 %v480
    %512 = vmatpush1.bf16.msra.mxu0 %v479
    %513 = vmatprep.subr.bf16.mxu0 %v482
    %514 = vmatpush1.bf16.msra.mxu0 %v481
    %515 = vmatprep.subr.bf16.mxu0 %v484
    %516 = vmatpush1.bf16.msra.mxu0 %v483
    %517 = vmatprep.subr.bf16.mxu0 0
    %518 = vmatpush1.bf16.msra.mxu0 0
    %519 = vmatprep.subr.bf16.mxu0 0
    %520 = vmatpush1.bf16.msra.mxu0 0
    %521 = vmatprep.subr.bf16.mxu0 0
    %522 = vmatpush1.bf16.msra.mxu0 0
    %523 = vmatprep.subr.bf16.mxu0 0
    %524 = vmatpush1.bf16.msra.mxu0 0
    %525 = vmatprep.subr.bf16.mxu0 0
    %526 = vmatpush1.bf16.msra.mxu0 0
    %527 = vmatprep.subr.bf16.mxu0 0
    %528 = vmatpush1.bf16.msra.mxu0 0
    %529 = vmatprep.subr.bf16.mxu0 0
    %530 = vmatpush1.bf16.msra.mxu0 0
    %531 = vmatprep.subr.bf16.mxu0 0
    %532 = vmatpush1.bf16.msra.mxu0 0
    %533 = vmatprep.mubr.bf16.mxu0 0
    %534 = vmatmul.mubr.bf16.gmra.mrb[0].mxu0 %v265
    %v535 = vpop.f32.mrb[0].mxu0
    %v536 = vadd.f32 0.0, %v535
    %v537 = vpop.f32.mrb[0].mxu0
    %v538 = vadd.f32 0.0, %v537
    %v539 = vpop.f32.mrb[0].mxu0
    %v540 = vadd.f32 0.0, %v539
    %v541 = vpop.f32.mrb[0].mxu0
    %v542 = vadd.f32 0.0, %v541
    %543 = vdwg.mxu0
    %v544 = vld [vmem:[%s8] sm:$0x3]
    %v545 = vld [vmem:[%s9] sm:$0x1]
    %v546 = vld [vmem:[#allocation4] sm:$0x1]
    %v547 = vld [vmem:[%s1] sm:$0xff]
    %v548 = vld [vmem:[%s1 + $0x8] sm:$0xff]
    %v549 = vadd.f32 %v397, %v536
    %v550 = vadd.f32 %v399, %v538
    %v551 = vadd.f32 %v401, %v540
    %v552 = vadd.f32 %v403, %v542
    %v554 = vlaneseq
    %v555 = vshrl.u32 %v554, 7
    %v556 = vsub.s32 0, %v555
    %v557 = vrot.slane %v544, %v556
    %v558 = vlaneseq
    %v559 = vshrl.u32 %v558, 7
    %v560 = vsub.s32 1, %v559
    %v561 = vrot.slane %v544, %v560
    %v564 = vadd.f32 %v549, %v557
    %v565 = vadd.f32 %v550, %v561
    %v566 = vadd.f32 %v551, %v557
    %v567 = vadd.f32 %v552, %v561
    %v568 = vmax.f32 %v564, 0.0
    %v569 = vmax.f32 %v565, 0.0
    %v570 = vmax.f32 %v566, 0.0
    %v571 = vmax.f32 %v567, 0.0
    %572 = vst [vmem:[#allocation13] sm:$0xff] %v568
    %573 = vst [vmem:[#allocation13 + $0x8] sm:$0xff] %v570
    %v575 = vlaneseq
    %v576 = vshrl.u32 %v575, 7
    %v577 = vsub.s32 0, %v576
    %v578 = vrot.slane %v545, %v577
    %v580 = vmul.f32 %v569, %v578
    %v581 = vmul.f32 %v571, %v578
    %582 = vadd.xlane.f32.xlu0 %v580
    %v583 = vpop.xlane.xlu0 %582
    %584 = vadd.xlane.f32.xlu0 %v581
    %v585 = vpop.xlane.xlu0 %584
    %v587 = vlaneseq
    %v588 = vshrl.u32 %v587, 7
    %v589 = vsub.s32 0, %v588
    %v590 = vrot.slane %v546, %v589
    %v592 = vadd.f32 %v583, %v590
    %v593 = vadd.f32 %v585, %v590
    %v594 = vsub.f32 %v592, %v547
    %v595 = vsub.f32 %v593, %v548
    %v596 = vand.u32 2147483647, %v594
    %v597 = vand.u32 2147483647, %v595
    %vm598 = vcmask 7168
    %599 = vst.msk [vmem:[%s13] sm:$0xff] %vm598, %v596
    %600 = vst.msk [vmem:[%s13 + $0x8] sm:$0xff] %vm598, %v597
    %v601 = vrcp.pop %v596
    %v602 = vmul.f32 1.0, %v601
    %v603 = vrcp.pop %v597
    %v604 = vmul.f32 1.0, %v603
    %v605 = vpow.f32 %v602, 0.7
    %v606 = vpow.f32 %v604, 0.7
    %v607 = vtanh.pop %v605
    %v608 = vtanh.pop %v606
    %v609 = vmul.f32 %v607, %v596
    %v610 = vmul.f32 %v608, %v597
    %v611 = vsel %vm598, %v609, 0.0
    %v612 = vsel %vm598, %v610, 0.0
    %v613 = vadd.f32 %v611, %v612
    %v614 = vrot.slane %v613, 4
    %v615 = vadd.f32 %v613, %v614
    %v616 = vrot.slane %v615, 2
    %v617 = vadd.f32 %v615, %v616
    %v618 = vrot.slane %v617, 1
    %v619 = vadd.f32 %v617, %v618
    %v620 = vmul.f32 %v619, 0.0625
    %621 = vst [vmem:[#allocation2] sm:$0xff] %v536
    %622 = vst [vmem:[#allocation2 + $0x8] sm:$0xff] %v538
    %623 = vst [vmem:[#allocation2 + $0x10] sm:$0xff] %v540
    %624 = vst [vmem:[#allocation2 + $0x18] sm:$0xff] %v542
    loop: start=0, step=1, limit=16
    $region62: #{tpu_custom_call.1} parent=1 // loop_pre_header
      _
    $region63: #{tpu_custom_call.1} parent=1 // loop_header
      %s626 = sphi 0, %s630
      %p627 = scmp.ge.s32.totalorder %s626, 16
    $region64: #{tpu_custom_call.1} parent=1 // loop_header_branch
      %629 = sbr.rel (%p627) target = $region68
    $region65: #{tpu_custom_call.1} parent=1 // loop_body
      %s631 = sld [smem:[#allocation5 + %s626]]
      %s632 = sshra.s32 %s631, 3
      %s633 = sand.u32 %s631, 7
      %s634 = sshra.s32 %s631, 3
      %s635 = sand.u32 %s631, 7
      %s636 = smul.u32 %s632, 2
      %s637 = smul.u32 %s636, 8
      %s638 = sadd.s32 %s637, %s635
      %s639 = scalar_lea.vmem [#allocation2], %s638
      %v640 = vld [vmem:[%s639] ss:$8 sm:$0x3]
      %v641 = vlaneseq
      %vm642 = vcmp.ge.s32.totalorder %v641, 0
      %vm643 = vcmp.lt.s32.totalorder %v641, 256
      %vm644 = vmand %vm642, %vm643
      %s645 = sshra.s32 %s626, 3
      %s646 = sand.u32 %s626, 7
      %s647 = sshra.s32 %s626, 3
      %s648 = sand.u32 %s626, 7
      %s649 = smul.u32 %s645, 2
      %s650 = smul.u32 %s649, 8
      %s651 = sadd.s32 %s650, %s648
      %s652 = scalar_lea.vmem [#allocation3], %s651
      %653 = vst.msk [vmem:[%s652] ss:$8 sm:$0x3] %vm644, %v640
      %654 = vst.msk [vmem:[%s652] ss:$8 sm:$0x0] %vm644, %v640
    $region66: #{tpu_custom_call.1} parent=1 // loop_footer
      %s630 = sadd.s32 1, %s626
    $region67: #{tpu_custom_call.1} parent=1 // loop_footer_branch
      %625 = sbr.rel target = $region63
    $region68: #{tpu_custom_call.1} parent=1 // loop_exit
      _
    %v655 = vld [vmem:[#allocation3] sm:$0xff]
    %v656 = vld [vmem:[#allocation3 + $0x8] sm:$0xff]
    %v657 = vld [vmem:[#allocation3 + $0x10] sm:$0xff]
    %v658 = vld [vmem:[#allocation3 + $0x18] sm:$0xff]
    %v659 = vadd.f32 %v397, %v655
    %v660 = vadd.f32 %v399, %v656
    %v661 = vadd.f32 %v401, %v657
    %v662 = vadd.f32 %v403, %v658
    %v663 = vadd.f32 %v659, %v557
    %v664 = vadd.f32 %v660, %v561
    %v665 = vadd.f32 %v661, %v557
    %v666 = vadd.f32 %v662, %v561
    %v667 = vmax.f32 %v663, 0.0
    %v668 = vmax.f32 %v664, 0.0
    %v669 = vmax.f32 %v665, 0.0
    %v670 = vmax.f32 %v666, 0.0
    %671 = vst [vmem:[#allocation14] sm:$0xff] %v667
    %672 = vst [vmem:[#allocation14 + $0x8] sm:$0xff] %v669
    %v673 = vmul.f32 %v668, %v578
    %v674 = vmul.f32 %v670, %v578
    %675 = vadd.xlane.f32.xlu0 %v673
    %v676 = vpop.xlane.xlu0 %675
    %677 = vadd.xlane.f32.xlu0 %v674
    %v678 = vpop.xlane.xlu0 %677
    %v679 = vadd.f32 %v676, %v590
    %v680 = vadd.f32 %v678, %v590
    %v681 = vld [vmem:[%s2] sm:$0xff]
    %v682 = vld [vmem:[%s2 + $0x8] sm:$0xff]
    %v683 = vsub.f32 %v679, %v681
    %v684 = vsub.f32 %v680, %v682
    %v685 = vand.u32 2147483647, %v683
    %v686 = vand.u32 2147483647, %v684
    %v687 = vrcp.pop %v685
    %v688 = vmul.f32 1.0, %v687
    %v689 = vrcp.pop %v686
    %v690 = vmul.f32 1.0, %v689
    %v691 = vpow.f32 %v688, 0.7
    %v692 = vpow.f32 %v690, 0.7
    %v693 = vtanh.pop %v691
    %v694 = vtanh.pop %v692
    %v695 = vmul.f32 %v693, %v685
    %v696 = vmul.f32 %v694, %v686
    %v697 = vsel %vm598, %v695, 0.0
    %v698 = vsel %vm598, %v696, 0.0
    %v699 = vadd.f32 %v697, %v698
    %v700 = vrot.slane %v699, 4
    %v701 = vadd.f32 %v699, %v700
    %v702 = vrot.slane %v701, 2
    %v703 = vadd.f32 %v701, %v702
    %v704 = vrot.slane %v703, 1
    %v705 = vadd.f32 %v703, %v704
    %v706 = vmul.f32 %v705, 0.0625
    %v707 = vmul.f32 %v706, 0.5
    %v708 = vadd.f32 %v707, %v620
    %vm709 = vcmask 0
    %710 = vst.msk [vmem:[#allocation16] sm:$0x1] %vm709, %v708
    // Predicated region
    $region69: #{tpu_custom_call.1} parent=1 // pred_check
      _
    $region70: #{tpu_custom_call.1} parent=1 // pred_check_branch
      %712 = sbr.rel (0) target = $region72
    $region71: #{tpu_custom_call.1} parent=1 // pred_region
      %s714 = ssub.s32 256, 256
      %715 = vsyncadd [#allocation7], %s714
      %s716 = sshll.u32 [#allocation13], 4
      %s717 = int_to_ptr.vmem [resolvable:$true] %s716
      %722 = dma.vmem_to_hbm [thread:$0]  %s717, 256, %s11, [#allocation7], 128, 128, 8
    $region72: #{tpu_custom_call.1} parent=1 // pred_fallthru
      _
    // Predicated region
    $region73: #{tpu_custom_call.1} parent=1 // pred_check
      _
    $region74: #{tpu_custom_call.1} parent=1 // pred_check_branch
      %724 = sbr.rel (0) target = $region76
    $region75: #{tpu_custom_call.1} parent=1 // pred_region
      %s726 = ssub.s32 256, 256
      %727 = vsyncadd [#allocation15], %s726
      %s728 = sshll.u32 [#allocation14], 4
      %s729 = int_to_ptr.vmem [resolvable:$true] %s728
      %734 = dma.vmem_to_hbm [thread:$0]  %s729, 256, %s12, [#allocation15], 128, 128, 8
    $region76: #{tpu_custom_call.1} parent=1 // pred_fallthru
      _
    // Predicated region
    $region77: #{tpu_custom_call.1} parent=1 // pred_check
      _
    $region78: #{tpu_custom_call.1} parent=1 // pred_check_branch
      %736 = sbr.rel (0) target = $region80
    $region79: #{tpu_custom_call.1} parent=1 // pred_region
      _
    $region80: #{tpu_custom_call.1} parent=1 // pred_fallthru
      _
    // Predicated region
    $region81: #{tpu_custom_call.1} parent=1 // pred_check
      _
    $region82: #{tpu_custom_call.1} parent=1 // pred_check_branch
      %738 = sbr.rel (0) target = $region84
    $region83: #{tpu_custom_call.1} parent=1 // pred_region
      %s740 = ssub.s32 16, 16
      %741 = vsyncadd [#allocation15], %s740
      %s743 = sshll.u32 [#allocation16], 4
      %s744 = int_to_ptr.vmem [resolvable:$true] %s743
      %746 = dma.vmem_to_hbm [thread:$0]  %s744, 16, %s14, [#allocation15]
    $region84: #{tpu_custom_call.1} parent=1 // pred_fallthru
      _
    // Predicated region
    $region85: #{tpu_custom_call.1} parent=1 // pred_check
      _
    $region86: #{tpu_custom_call.1} parent=1 // pred_check_branch
      %748 = sbr.rel (0) target = $region88
    $region87: #{tpu_custom_call.1} parent=1 // pred_region
      %749 = dma.done [#allocation7], 256
    $region88: #{tpu_custom_call.1} parent=1 // pred_fallthru
      _
    // Predicated region
    $region89: #{tpu_custom_call.1} parent=1 // pred_check
      _
    $region90: #{tpu_custom_call.1} parent=1 // pred_check_branch
      %751 = sbr.rel (0) target = $region92
    $region91: #{tpu_custom_call.1} parent=1 // pred_region
      %752 = dma.done [#allocation15], 256
    $region92: #{tpu_custom_call.1} parent=1 // pred_fallthru
      _
    // Predicated region
    $region93: #{tpu_custom_call.1} parent=1 // pred_check
      _
    $region94: #{tpu_custom_call.1} parent=1 // pred_check_branch
      %754 = sbr.rel (0) target = $region96
    $region95: #{tpu_custom_call.1} parent=1 // pred_region
      _
    $region96: #{tpu_custom_call.1} parent=1 // pred_fallthru
      _
    // Predicated region
    $region97: #{tpu_custom_call.1} parent=1 // pred_check
      _
    $region98: #{tpu_custom_call.1} parent=1 // pred_check_branch
      %756 = sbr.rel (0) target = $region100
    $region99: #{tpu_custom_call.1} parent=1 // pred_region
      %757 = dma.done [#allocation15], 16
    $region100: #{tpu_custom_call.1} parent=1 // pred_fallthru
      _
    %758 = vsyncpa [#allocation6], 1
    %759 = vsyncpa [#allocation11], 1
    %760 = vsyncpa [#allocation7], 1
    %761 = vsyncpa [#allocation15], 1
    %762 = vsyncpa [#allocation8], 1

</llo_original>
